<compile_context>
chip_gen: v6e
topology: v6e:2x2x1
jax: 0.10.0
libtpu: 0.0.40
codegen_flags: <defaults>
</compile_context>

<pallas_src>
import functools

import jax
import jax.numpy as jnp
from jax.experimental import pallas as pl
from jax.experimental.pallas import tpu as pltpu


# ---------------------------------------------------------------------------
# Tiled matmul (+ optional bias / ELU in the finalize step) Pallas kernel
# ---------------------------------------------------------------------------

def _mm_kernel(a_ref, b_ref, bias_ref, o_ref, acc_ref, *, apply_elu):
    k = pl.program_id(2)

    @pl.when(k == 0)
    def _init():
        acc_ref[...] = jnp.zeros_like(acc_ref)

    acc_ref[...] += jnp.dot(a_ref[...], b_ref[...],
                            preferred_element_type=jnp.float32)

    @pl.when(k == pl.num_programs(2) - 1)
    def _finalize():
        r = acc_ref[...] + bias_ref[...]          # bias add only once, at the end
        if apply_elu:
            r = jnp.where(r > 0, r, jnp.exp(r) - 1.0)
        o_ref[...] = r.astype(o_ref.dtype)


def _round_up(x, m):
    return ((x + m - 1) // m) * m


def _pad2d(x, rows, cols):
    r, c = x.shape
    if r == rows and c == cols:
        return x
    return jnp.pad(x, ((0, rows - r), (0, cols - c)))


def _pick_tiles(m, k, n):
    # M tile on the sublane axis (multiple of 8), N/K tiles lane-dense (128).
    tm = 256 if m >= 256 else _round_up(m, 8)
    tn = 256 if n >= 256 else _round_up(n, 128)
    tk = 512 if k >= 512 else _round_up(k, 128)
    return tm, tn, tk


def _tiled_matmul(a, b, bias=None, apply_elu=False, out_dtype=jnp.float32):
    """out = a @ b (+ bias) (optionally ELU).  a:[M,K], b:[K,N], bias:[N]|None."""
    m, k = a.shape
    k2, n = b.shape
    assert k == k2
    tm, tn, tk = _pick_tiles(m, k, n)
    mp, kp, np_ = _round_up(m, tm), _round_up(k, tk), _round_up(n, tn)

    a_p = _pad2d(a, mp, kp)
    b_p = _pad2d(b, kp, np_)
    if bias is None:
        bias_p = jnp.zeros((1, np_), dtype=jnp.float32)
    else:
        bias_p = _pad2d(bias.astype(jnp.float32).reshape(1, n), 1, np_)

    grid = (mp // tm, np_ // tn, kp // tk)
    itemsize = jnp.dtype(out_dtype).itemsize
    cost = pl.CostEstimate(
        flops=2 * mp * np_ * kp,
        transcendentals=mp * np_ if apply_elu else 0,
        bytes_accessed=(a_p.size + b_p.size + bias_p.size + mp * np_) * itemsize,
    )

    out = pl.pallas_call(
        functools.partial(_mm_kernel, apply_elu=apply_elu),
        out_shape=jax.ShapeDtypeStruct((mp, np_), out_dtype),
        grid_spec=pltpu.PrefetchScalarGridSpec(
            num_scalar_prefetch=0,
            grid=grid,
            in_specs=[
                pl.BlockSpec((tm, tk), lambda i, j, kk: (i, kk)),
                pl.BlockSpec((tk, tn), lambda i, j, kk: (kk, j)),
                pl.BlockSpec((1, tn), lambda i, j, kk: (0, j)),
            ],
            out_specs=pl.BlockSpec((tm, tn), lambda i, j, kk: (i, j)),
            scratch_shapes=[pltpu.VMEM((tm, tn), jnp.float32)],
        ),
        compiler_params=pltpu.CompilerParams(
            dimension_semantics=("parallel", "parallel", "arbitrary"),
            vmem_limit_bytes=32 * 1024 * 1024,
        ),
        cost_estimate=cost,
    )(a_p, b_p, bias_p)

    return out[:m, :n]


# ---------------------------------------------------------------------------
# MeanAggregator forward (eval mode: dropout = identity)
# ---------------------------------------------------------------------------

def mean_aggregator_forward(adj_w, feat, weight, bias, apply_elu=False):
    """adj_w: [N_dst, N_src] dense edge weights, feat: [N_src, in_feats],
    weight: [in_feats, out_feats], bias: [out_feats] or None."""
    n_dst, n_src = adj_w.shape
    in_feats, out_feats = weight.shape
    assert feat.shape == (n_src, in_feats)
    out_dtype = feat.dtype

    if in_feats > out_feats:
        # project once (hoisted out of the per-dst-tile loop), then aggregate
        h = _tiled_matmul(feat, weight, bias=None, apply_elu=False,
                          out_dtype=out_dtype)                  # [N_src, out]
        rst = _tiled_matmul(adj_w, h, bias=bias, apply_elu=apply_elu,
                            out_dtype=out_dtype)                # [N_dst, out]
    else:
        # aggregate first, then project
        agg = _tiled_matmul(adj_w, feat, bias=None, apply_elu=False,
                            out_dtype=out_dtype)                # [N_dst, in]
        rst = _tiled_matmul(agg, weight, bias=bias, apply_elu=apply_elu,
                            out_dtype=out_dtype)                # [N_dst, out]
    return rst


def _reference(adj_w, feat, weight, bias, apply_elu=False):
    in_feats, out_feats = weight.shape
    if in_feats > out_feats:
        rst = adj_w @ (feat @ weight)
    else:
        rst = (adj_w @ feat) @ weight
    if bias is not None:
        rst = rst + bias[None, :]
    if apply_elu:
        rst = jnp.where(rst > 0, rst, jnp.exp(rst) - 1.0)
    return rst


# ---------------------------------------------------------------------------
# Demo / correctness check
# ---------------------------------------------------------------------------

def _make_right_norm_adj(key, n_dst, n_src, p=0.4):
    """Dense adjacency with HANLayer's adj_norm='right' edge weights (1/in_deg)."""
    mask = (jax.random.uniform(key, (n_dst, n_src)) < p).astype(jnp.float32)
    deg = mask.sum(axis=1, keepdims=True)
    inv = jnp.where(deg > 0, 1.0 / deg, 0.0)
    return mask * inv


if __name__ == "__main__":
    key = jax.random.PRNGKey(0)
    k1, k2, k3, k4, k5, k6, k7, k8 = jax.random.split(key, 8)

    # --- branch 1: in_feats > out_feats (project first) ---------------------
    n_dst, n_src = 40, 56
    in_feats, out_feats = 96, 24          # e.g. out_size=8 * num_heads=3
    feat = jax.random.normal(k1, (n_src, in_feats), dtype=jnp.float32)
    adj_w = _make_right_norm_adj(k2, n_dst, n_src)
    weight = jax.random.normal(k3, (in_feats, out_feats), dtype=jnp.float32) \
        * (1.0 / jnp.sqrt(in_feats))
    bias = 0.1 * jax.random.normal(k4, (out_feats,), dtype=jnp.float32)

    out1 = mean_aggregator_forward(adj_w, feat, weight, bias, apply_elu=True)
    out1 = jax.block_until_ready(out1)
    ref1 = _reference(adj_w, feat, weight, bias, apply_elu=True)
    assert out1.shape == (n_dst, out_feats)
    assert jnp.allclose(out1, ref1, atol=1e-4, rtol=1e-4)

    # --- branch 2: in_feats <= out_feats (aggregate first) ------------------
    in_feats2, out_feats2 = 16, 64
    feat2 = jax.random.normal(k5, (n_src, in_feats2), dtype=jnp.float32)
    adj_w2 = _make_right_norm_adj(k6, n_dst, n_src, p=0.3)
    weight2 = jax.random.normal(k7, (in_feats2, out_feats2), dtype=jnp.float32) \
        * (1.0 / jnp.sqrt(in_feats2))
    bias2 = 0.1 * jax.random.normal(k8, (out_feats2,), dtype=jnp.float32)

    out2 = mean_aggregator_forward(adj_w2, feat2, weight2, bias2, apply_elu=True)
    out2 = jax.block_until_ready(out2)
    ref2 = _reference(adj_w2, feat2, weight2, bias2, apply_elu=True)
    assert out2.shape == (n_dst, out_feats2)
    assert jnp.allclose(out2, ref2, atol=1e-4, rtol=1e-4)

    # TODO(synk): DGL graph construction (metapath_reachable_graph) and the GAT /
    # SemanticAttention paths of HAN are host-side / separate modules and are not
    # part of this aggregation kernel; training-mode dropout would use
    # pltpu.prng_seed + pltpu.stateful_bernoulli inside the kernel.
    print("KERNEL_OK")
</pallas_src>

<mosaic_0001>
module attributes {stable_mosaic.version = 11 : i64} {
  func.func @_mm_kernel(%arg0: i32, %arg1: i32, %arg2: i32, %arg3: memref<56x128xf32, #tpu.memory_space<vmem>>, %arg4: memref<128x128xf32, #tpu.memory_space<vmem>>, %arg5: memref<1x128xf32, #tpu.memory_space<vmem>>, %arg6: memref<56x128xf32, #tpu.memory_space<vmem>>, %arg7: memref<56x128xf32, #tpu.memory_space<vmem>>) attributes {dimension_semantics = [#tpu.dimension_semantics<parallel>, #tpu.dimension_semantics<parallel>, #tpu.dimension_semantics<arbitrary>], iteration_bounds = array<i64: 1, 1, 1>, scalar_prefetch = 0 : i64, scratch_operands = 1 : i64, tpu.core_type = #tpu.core_type<tc>, window_params = [{transform_indices = @transform_0, window_bounds = array<i64: 56, 128>}, {transform_indices = @transform_1, window_bounds = array<i64: 128, 128>}, {transform_indices = @transform_2, window_bounds = array<i64: 1, 128>}, {transform_indices = @transform_3, window_bounds = array<i64: 56, 128>}]} {
    %c0_i32 = arith.constant 0 : i32
    %0 = arith.cmpi eq, %arg2, %c0_i32 : i32
    %1 = arith.extui %0 : i1 to i32
    %c0_i32_0 = arith.constant 0 : i32
    %2 = arith.cmpi ne, %1, %c0_i32_0 : i32
    scf.if %2 {
      %cst_10 = arith.constant 0.000000e+00 : f32
      %12 = vector.broadcast %cst_10 : f32 to vector<56x128xf32>
      %c0_11 = arith.constant 0 : index
      %c0_12 = arith.constant 0 : index
      %13 = vector.load %arg7[%c0_11, %c0_12] : memref<56x128xf32, #tpu.memory_space<vmem>>, vector<56x128xf32>
      tpu.vector_store %arg7[%c0_11, %c0_12], %12 {strides = array<i32>} : memref<56x128xf32, #tpu.memory_space<vmem>>, vector<56x128xf32>,
    } else {
    }
    %c0 = arith.constant 0 : index
    %c0_1 = arith.constant 0 : index
    %3 = vector.load %arg7[%c0, %c0_1] : memref<56x128xf32, #tpu.memory_space<vmem>>, vector<56x128xf32>
    %c0_2 = arith.constant 0 : index
    %c0_3 = arith.constant 0 : index
    %4 = vector.load %arg3[%c0_2, %c0_3] : memref<56x128xf32, #tpu.memory_space<vmem>>, vector<56x128xf32>
    %c0_4 = arith.constant 0 : index
    %c0_5 = arith.constant 0 : index
    %5 = vector.load %arg4[%c0_4, %c0_5] : memref<128x128xf32, #tpu.memory_space<vmem>>, vector<128x128xf32>
    %cst = arith.constant dense<0.000000e+00> : vector<56x128xf32>
    %6 = tpu.matmul %4, %5, %cst {dimension_numbers = #tpu.dot_dimension_numbers<[1], [0], [0], [1], [0, 0, 1, 1], [], []>} : vector<56x128xf32>, vector<128x128xf32>, vector<56x128xf32> -> vector<56x128xf32>
    %7 = arith.addf %3, %6 : vector<56x128xf32>
    %c0_6 = arith.constant 0 : index
    %c0_7 = arith.constant 0 : index
    %8 = vector.load %arg7[%c0_6, %c0_7] : memref<56x128xf32, #tpu.memory_space<vmem>>, vector<56x128xf32>
    tpu.vector_store %arg7[%c0_6, %c0_7], %7 {strides = array<i32>} : memref<56x128xf32, #tpu.memory_space<vmem>>, vector<56x128xf32>,
    %c0_i32_8 = arith.constant 0 : i32
    %9 = arith.cmpi eq, %arg2, %c0_i32_8 : i32
    %10 = arith.extui %9 : i1 to i32
    %c0_i32_9 = arith.constant 0 : i32
    %11 = arith.cmpi ne, %10, %c0_i32_9 : i32
    scf.if %11 {
      %c0_10 = arith.constant 0 : index
      %c0_11 = arith.constant 0 : index
      %12 = vector.load %arg7[%c0_10, %c0_11] : memref<56x128xf32, #tpu.memory_space<vmem>>, vector<56x128xf32>
      %c0_12 = arith.constant 0 : index
      %c0_13 = arith.constant 0 : index
      %13 = vector.load %arg5[%c0_12, %c0_13] : memref<1x128xf32, #tpu.memory_space<vmem>>, vector<1x128xf32>
      %14 = vector.broadcast %13 : vector<1x128xf32> to vector<56x128xf32>
      %15 = arith.addf %12, %14 : vector<56x128xf32>
      %c0_14 = arith.constant 0 : index
      %c0_15 = arith.constant 0 : index
      %16 = vector.load %arg6[%c0_14, %c0_15] : memref<56x128xf32, #tpu.memory_space<vmem>>, vector<56x128xf32>
      tpu.vector_store %arg6[%c0_14, %c0_15], %15 {strides = array<i32>} : memref<56x128xf32, #tpu.memory_space<vmem>>, vector<56x128xf32>,
    } else {
    }
    return
  }
  func.func @transform_0(%arg0: i32, %arg1: i32, %arg2: i32) -> (i32, i32) {
    %c0_i32 = arith.constant 0 : i32
    return %arg0, %arg2 : i32, i32
  }
  func.func @transform_1(%arg0: i32, %arg1: i32, %arg2: i32) -> (i32, i32) {
    %c0_i32 = arith.constant 0 : i32
    return %arg2, %arg1 : i32, i32
  }
  func.func @transform_2(%arg0: i32, %arg1: i32, %arg2: i32) -> (i32, i32) {
    %c0_i32 = arith.constant 0 : i32
    %c0_i32_0 = arith.constant 0 : i32
    return %c0_i32, %arg1 : i32, i32
  }
  func.func @transform_3(%arg0: i32, %arg1: i32, %arg2: i32) -> (i32, i32) {
    %c0_i32 = arith.constant 0 : i32
    return %arg0, %arg1 : i32, i32
  }
}

</mosaic_0001>

<llo_original>
// kernel: tpu_custom_call.1
$region0: #{tpu_custom_call.1}
  #allocation0 [shape = 'u32[]', space=smem, size = 0x4, offset = 0x4, fixed_abs, tag = 'smem constant byte address 0x4 - core index']
  #allocation1 [shape = 'u32[144,128]{1,0:T(1,128)}', space=vmem, size = 0x12000, scoped, tag = 'internal scratch']
  #allocation2 [shape = 'f32[56,128]{1,0:T(8,128)}', space=vmem, size = 0x7000, scoped, tag = 'scratch operand']
  %s0 = inlined_call_operand.hbm [shape: f32[56,128], index: 0, kind: input, shape index: {}]
  %s1 = inlined_call_operand.hbm [shape: f32[128,128], index: 1, kind: input, shape index: {}]
  %s2 = inlined_call_operand.vmem [shape: f32[1,128], index: 2, kind: input, shape index: {}]
  %s3 = inlined_call_operand.hbm [shape: f32[56,128], index: 3, kind: output, shape index: {}]
  %s4 = sld [smem:[#allocation0]]
  $region38: #{tpu_custom_call.1} parent=0
    _
  %s6 = ssub.s32 1, %s4
  %s7 = scalar_select 0, %s6, %s4
  $region1: #{tpu_custom_call.1} parent=0
    #allocation3 [shape = 'u8[28672]{0}', space=vmem, size = 0x7000, scoped, tag = 'input window, operand 0, single buffered']
    #allocation4 [shape = 's32[1]{0}', space=sflag, size = 0x4, scoped, tag = 'scoped memory for tpu_custom_call.1']
    #allocation5 [shape = 's32[1]{0}', space=sflag, size = 0x4, scoped, tag = 'scoped memory for tpu_custom_call.1']
    #allocation6 [shape = 'u8[65536]{0}', space=vmem, size = 0x10000, scoped, tag = 'input window, operand 1, single buffered']
    #allocation7 [shape = 's32[1]{0}', space=sflag, size = 0x4, scoped, tag = 'scoped memory for tpu_custom_call.1']
    #allocation8 [shape = 'u8[28672]{0}', space=vmem, size = 0x7000, scoped, tag = 'output window, operand 0, single buffered']
    %8 = vsyncpa [#allocation4], 0
    %9 = vsyncpa [#allocation7], 0
    %10 = vsyncpa [#allocation5], 0
    // Predicated region
    $region2: #{tpu_custom_call.1} parent=1 // pred_check
      _
    $region3: #{tpu_custom_call.1} parent=1 // pred_check_branch
      %12 = sbr.rel (0) target = $region5
    $region4: #{tpu_custom_call.1} parent=1 // pred_region
      %s14 = ssub.s32 896, 896
      %15 = vsyncadd [#allocation4], %s14
      %s16 = sshll.u32 [#allocation3], 4
      %s17 = int_to_ptr.vmem [resolvable:$true] %s16
      %22 = dma.hbm_to_vmem [thread:$0]  %s0, 896, %s17, [#allocation4], 128, 128, 8
    $region5: #{tpu_custom_call.1} parent=1 // pred_fallthru
      _
    // Predicated region
    $region6: #{tpu_custom_call.1} parent=1 // pred_check
      _
    $region7: #{tpu_custom_call.1} parent=1 // pred_check_branch
      %24 = sbr.rel (0) target = $region9
    $region8: #{tpu_custom_call.1} parent=1 // pred_region
      %s26 = ssub.s32 2048, 2048
      %27 = vsyncadd [#allocation7], %s26
      %s28 = sshll.u32 [#allocation6], 4
      %s29 = int_to_ptr.vmem [resolvable:$true] %s28
      %34 = dma.hbm_to_vmem [thread:$0]  %s1, 2048, %s29, [#allocation7], 128, 128, 8
    $region9: #{tpu_custom_call.1} parent=1 // pred_fallthru
      _
    // Predicated region
    $region10: #{tpu_custom_call.1} parent=1 // pred_check
      _
    $region11: #{tpu_custom_call.1} parent=1 // pred_check_branch
      %36 = sbr.rel (0) target = $region13
    $region12: #{tpu_custom_call.1} parent=1 // pred_region
      _
    $region13: #{tpu_custom_call.1} parent=1 // pred_fallthru
      _
    // Predicated region
    $region14: #{tpu_custom_call.1} parent=1 // pred_check
      _
    $region15: #{tpu_custom_call.1} parent=1 // pred_check_branch
      %38 = sbr.rel (0) target = $region17
    $region16: #{tpu_custom_call.1} parent=1 // pred_region
      %39 = dma.done [#allocation4], 896
    $region17: #{tpu_custom_call.1} parent=1 // pred_fallthru
      _
    // Predicated region
    $region18: #{tpu_custom_call.1} parent=1 // pred_check
      _
    $region19: #{tpu_custom_call.1} parent=1 // pred_check_branch
      %41 = sbr.rel (0) target = $region21
    $region20: #{tpu_custom_call.1} parent=1 // pred_region
      %42 = dma.done [#allocation7], 2048
    $region21: #{tpu_custom_call.1} parent=1 // pred_fallthru
      _
    %p43 = scmp.eq.s32.totalorder 0, 0
    // Predicated region
    $region22: #{tpu_custom_call.1} parent=1 // pred_check
      %p44 = pneg %p43
    $region23: #{tpu_custom_call.1} parent=1 // pred_check_branch
      %46 = sbr.rel (%p44) target = $region25
    $region24: #{tpu_custom_call.1} parent=1 // pred_region
      %47 = vst [vmem:[#allocation2] sm:$0xff] 0.0
      %48 = vst [vmem:[#allocation2 + $0x8] sm:$0xff] 0.0
      %49 = vst [vmem:[#allocation2 + $0x10] sm:$0xff] 0.0
      %50 = vst [vmem:[#allocation2 + $0x18] sm:$0xff] 0.0
      %51 = vst [vmem:[#allocation2 + $0x20] sm:$0xff] 0.0
      %52 = vst [vmem:[#allocation2 + $0x28] sm:$0xff] 0.0
      %53 = vst [vmem:[#allocation2 + $0x30] sm:$0xff] 0.0
    $region25: #{tpu_custom_call.1} parent=1 // pred_fallthru
      _
    %v54 = vld [vmem:[#allocation2] sm:$0xff]
    %v55 = vld [vmem:[#allocation2 + $0x8] sm:$0xff]
    %v56 = vld [vmem:[#allocation2 + $0x10] sm:$0xff]
    %v57 = vld [vmem:[#allocation2 + $0x18] sm:$0xff]
    %v58 = vld [vmem:[#allocation2 + $0x20] sm:$0xff]
    %v59 = vld [vmem:[#allocation2 + $0x28] sm:$0xff]
    %v60 = vld [vmem:[#allocation2 + $0x30] sm:$0xff]
    %v61 = vld [vmem:[#allocation3] sm:$0xff]
    %v62 = vld [vmem:[#allocation3 + $0x8] sm:$0xff]
    %v63 = vld [vmem:[#allocation3 + $0x10] sm:$0xff]
    %v64 = vld [vmem:[#allocation3 + $0x18] sm:$0xff]
    %v65 = vld [vmem:[#allocation3 + $0x20] sm:$0xff]
    %v66 = vld [vmem:[#allocation3 + $0x28] sm:$0xff]
    %v67 = vld [vmem:[#allocation3 + $0x30] sm:$0xff]
    %v68 = vld [vmem:[#allocation6] sm:$0xff]
    %v69 = vld [vmem:[#allocation6 + $0x8] sm:$0xff]
    %v70 = vld [vmem:[#allocation6 + $0x10] sm:$0xff]
    %v71 = vld [vmem:[#allocation6 + $0x18] sm:$0xff]
    %v72 = vld [vmem:[#allocation6 + $0x20] sm:$0xff]
    %v73 = vld [vmem:[#allocation6 + $0x28] sm:$0xff]
    %v74 = vld [vmem:[#allocation6 + $0x30] sm:$0xff]
    %v75 = vld [vmem:[#allocation6 + $0x38] sm:$0xff]
    %v76 = vld [vmem:[#allocation6 + $0x40] sm:$0xff]
    %v77 = vld [vmem:[#allocation6 + $0x48] sm:$0xff]
    %v78 = vld [vmem:[#allocation6 + $0x50] sm:$0xff]
    %v79 = vld [vmem:[#allocation6 + $0x58] sm:$0xff]
    %v80 = vld [vmem:[#allocation6 + $0x60] sm:$0xff]
    %v81 = vld [vmem:[#allocation6 + $0x68] sm:$0xff]
    %v82 = vld [vmem:[#allocation6 + $0x70] sm:$0xff]
    %v83 = vld [vmem:[#allocation6 + $0x78] sm:$0xff]
    %84 = vmatprep.subr.mxu0 0.0
    %85 = vmatpush1.msra.mxu0 %v83
    %86 = vmatprep.subr.mxu0 0.0
    %87 = vmatpush1.msra.mxu0 %v82
    %88 = vmatprep.subr.mxu0 0.0
    %89 = vmatpush1.msra.mxu0 %v81
    %90 = vmatprep.subr.mxu0 0.0
    %91 = vmatpush1.msra.mxu0 %v80
    %92 = vmatprep.subr.mxu0 0.0
    %93 = vmatpush1.msra.mxu0 %v79
    %94 = vmatprep.subr.mxu0 0.0
    %95 = vmatpush1.msra.mxu0 %v78
    %96 = vmatprep.subr.mxu0 0.0
    %97 = vmatpush1.msra.mxu0 %v77
    %98 = vmatprep.subr.mxu0 0.0
    %99 = vmatpush1.msra.mxu0 %v76
    %100 = vmatprep.subr.mxu0 0.0
    %101 = vmatpush1.msra.mxu0 %v75
    %102 = vmatprep.subr.mxu0 0.0
    %103 = vmatpush1.msra.mxu0 %v74
    %104 = vmatprep.subr.mxu0 0.0
    %105 = vmatpush1.msra.mxu0 %v73
    %106 = vmatprep.subr.mxu0 0.0
    %107 = vmatpush1.msra.mxu0 %v72
    %108 = vmatprep.subr.mxu0 0.0
    %109 = vmatpush1.msra.mxu0 %v71
    %110 = vmatprep.subr.mxu0 0.0
    %111 = vmatpush1.msra.mxu0 %v70
    %112 = vmatprep.subr.mxu0 0.0
    %113 = vmatpush1.msra.mxu0 %v69
    %114 = vmatprep.subr.mxu0 0.0
    %115 = vmatpush1.msra.mxu0 %v68
    %116 = vmatprep.subr.mxu0 0.0
    %117 = vmatpush2.msra.mxu0 0.0
    %118 = vmatprep.subr.mxu0 0.0
    %119 = vmatpush2.msra.mxu0 0.0
    %120 = vmatprep.subr.mxu0 0.0
    %121 = vmatpush2.msra.mxu0 0.0
    %122 = vmatprep.subr.mxu0 0.0
    %123 = vmatpush2.msra.mxu0 0.0
    %124 = vmatprep.subr.mxu0 0.0
    %125 = vmatpush2.msra.mxu0 0.0
    %126 = vmatprep.subr.mxu0 0.0
    %127 = vmatpush2.msra.mxu0 0.0
    %128 = vmatprep.subr.mxu0 0.0
    %129 = vmatpush2.msra.mxu0 0.0
    %130 = vmatprep.subr.mxu0 0.0
    %131 = vmatpush2.msra.mxu0 0.0
    %132 = vmatprep.subr.mxu0 0.0
    %133 = vmatpush2.msra.mxu0 0.0
    %134 = vmatprep.subr.mxu0 0.0
    %135 = vmatpush2.msra.mxu0 0.0
    %136 = vmatprep.subr.mxu0 0.0
    %137 = vmatpush2.msra.mxu0 0.0
    %138 = vmatprep.subr.mxu0 0.0
    %139 = vmatpush2.msra.mxu0 0.0
    %140 = vmatprep.subr.mxu0 0.0
    %141 = vmatpush2.msra.mxu0 0.0
    %142 = vmatprep.subr.mxu0 0.0
    %143 = vmatpush2.msra.mxu0 0.0
    %144 = vmatprep.subr.mxu0 0.0
    %145 = vmatpush2.msra.mxu0 0.0
    %146 = vmatprep.subr.mxu0 0.0
    %147 = vmatpush2.msra.mxu0 0.0
    %148 = vmatprep.mubr.f32.mxu0 0.0
    %149 = vmatmul.mubr.f32.gmra.mxu0 %v61
    %v150 = vpop.f32.mrf.mxu0
    %v151 = vadd.f32 0.0, %v150
    %v152 = vpop.f32.mrf.mxu0
    %153 = vmatprep.mubr.f32.mxu0 0.0
    %154 = vmatmul.mubr.f32.gmra.mxu0 %v62
    %v155 = vpop.f32.mrf.mxu0
    %v156 = vadd.f32 0.0, %v155
    %v157 = vpop.f32.mrf.mxu0
    %158 = vmatprep.mubr.f32.mxu0 0.0
    %159 = vmatmul.mubr.f32.gmra.mxu0 %v63
    %v160 = vpop.f32.mrf.mxu0
    %v161 = vadd.f32 0.0, %v160
    %v162 = vpop.f32.mrf.mxu0
    %163 = vmatprep.mubr.f32.mxu0 0.0
    %164 = vmatmul.mubr.f32.gmra.mxu0 %v64
    %v165 = vpop.f32.mrf.mxu0
    %v166 = vadd.f32 0.0, %v165
    %v167 = vpop.f32.mrf.mxu0
    %168 = vmatprep.mubr.f32.mxu0 0.0
    %169 = vmatmul.mubr.f32.gmra.mxu0 %v65
    %v170 = vpop.f32.mrf.mxu0
    %v171 = vadd.f32 0.0, %v170
    %v172 = vpop.f32.mrf.mxu0
    %173 = vmatprep.mubr.f32.mxu0 0.0
    %174 = vmatmul.mubr.f32.gmra.mxu0 %v66
    %v175 = vpop.f32.mrf.mxu0
    %v176 = vadd.f32 0.0, %v175
    %v177 = vpop.f32.mrf.mxu0
    %178 = vmatprep.mubr.f32.mxu0 0.0
    %179 = vmatmul.mubr.f32.gmra.mxu0 %v67
    %v180 = vpop.f32.mrf.mxu0
    %v181 = vadd.f32 0.0, %v180
    %v182 = vpop.f32.mrf.mxu0
    %183 = vdwg.mxu0
    %v184 = vadd.f32 %v54, %v151
    %v185 = vadd.f32 %v55, %v156
    %v186 = vadd.f32 %v56, %v161
    %v187 = vadd.f32 %v57, %v166
    %v188 = vadd.f32 %v58, %v171
    %v189 = vadd.f32 %v59, %v176
    %v190 = vadd.f32 %v60, %v181
    %191 = vst [vmem:[#allocation2] sm:$0xff] %v184
    %192 = vst [vmem:[#allocation2 + $0x8] sm:$0xff] %v185
    %193 = vst [vmem:[#allocation2 + $0x10] sm:$0xff] %v186
    %194 = vst [vmem:[#allocation2 + $0x18] sm:$0xff] %v187
    %195 = vst [vmem:[#allocation2 + $0x20] sm:$0xff] %v188
    %196 = vst [vmem:[#allocation2 + $0x28] sm:$0xff] %v189
    %197 = vst [vmem:[#allocation2 + $0x30] sm:$0xff] %v190
    // Predicated region
    $region26: #{tpu_custom_call.1} parent=1 // pred_check
      %p198 = pneg %p43
    $region27: #{tpu_custom_call.1} parent=1 // pred_check_branch
      %200 = sbr.rel (%p198) target = $region29
    $region28: #{tpu_custom_call.1} parent=1 // pred_region
      %v201 = vld [vmem:[#allocation2] sm:$0xff]
      %v202 = vld [vmem:[#allocation2 + $0x8] sm:$0xff]
      %v203 = vld [vmem:[#allocation2 + $0x10] sm:$0xff]
      %v204 = vld [vmem:[#allocation2 + $0x18] sm:$0xff]
      %v205 = vld [vmem:[#allocation2 + $0x20] sm:$0xff]
      %v206 = vld [vmem:[#allocation2 + $0x28] sm:$0xff]
      %v207 = vld [vmem:[#allocation2 + $0x30] sm:$0xff]
      %v208 = vld [vmem:[%s2] sm:$0x1]
      %v210 = vlaneseq
      %v211 = vshrl.u32 %v210, 7
      %v212 = vsub.s32 0, %v211
      %v213 = vrot.slane %v208, %v212
      %v215 = vadd.f32 %v201, %v213
      %v216 = vadd.f32 %v202, %v213
      %v217 = vadd.f32 %v203, %v213
      %v218 = vadd.f32 %v204, %v213
      %v219 = vadd.f32 %v205, %v213
      %v220 = vadd.f32 %v206, %v213
      %v221 = vadd.f32 %v207, %v213
      %222 = vst [vmem:[#allocation8] sm:$0xff] %v215
      %223 = vst [vmem:[#allocation8 + $0x8] sm:$0xff] %v216
      %224 = vst [vmem:[#allocation8 + $0x10] sm:$0xff] %v217
      %225 = vst [vmem:[#allocation8 + $0x18] sm:$0xff] %v218
      %226 = vst [vmem:[#allocation8 + $0x20] sm:$0xff] %v219
      %227 = vst [vmem:[#allocation8 + $0x28] sm:$0xff] %v220
      %228 = vst [vmem:[#allocation8 + $0x30] sm:$0xff] %v221
    $region29: #{tpu_custom_call.1} parent=1 // pred_fallthru
      _
    // Predicated region
    $region30: #{tpu_custom_call.1} parent=1 // pred_check
      _
    $region31: #{tpu_custom_call.1} parent=1 // pred_check_branch
      %230 = sbr.rel (0) target = $region33
    $region32: #{tpu_custom_call.1} parent=1 // pred_region
      %s232 = ssub.s32 896, 896
      %233 = vsyncadd [#allocation5], %s232
      %s234 = sshll.u32 [#allocation8], 4
      %s235 = int_to_ptr.vmem [resolvable:$true] %s234
      %240 = dma.vmem_to_hbm [thread:$0]  %s235, 896, %s3, [#allocation5], 128, 128, 8
    $region33: #{tpu_custom_call.1} parent=1 // pred_fallthru
      _
    // Predicated region
    $region34: #{tpu_custom_call.1} parent=1 // pred_check
      _
    $region35: #{tpu_custom_call.1} parent=1 // pred_check_branch
      %242 = sbr.rel (0) target = $region37
    $region36: #{tpu_custom_call.1} parent=1 // pred_region
      %243 = dma.done [#allocation5], 896
    $region37: #{tpu_custom_call.1} parent=1 // pred_fallthru
      _
    %244 = vsyncpa [#allocation4], 1
    %245 = vsyncpa [#allocation7], 1
    %246 = vsyncpa [#allocation5], 1

</llo_original>
